<compile_context>
chip_gen: v7x
topology: tpu7x:2x2x1
jax: 0.10.0
libtpu: 0.0.40
codegen_flags: <defaults>
</compile_context>

<pallas_src>
import functools
from typing import NamedTuple

import jax
import jax.numpy as jnp
from jax.experimental import pallas as pl
from jax.experimental.pallas import tpu as pltpu

_LANE = 128
_VMEM = pl.BlockSpec(memory_space=pltpu.MemorySpace.VMEM)


def _round_up(n, m):
    return ((n + m - 1) // m) * m


# -----------------------------------------------------------------------------
# Kernels
# -----------------------------------------------------------------------------
def _embed_body(x_ref, w1, b1, w2, b2, o_ref):
    # x_ref: [B, D] (input dtype; cast to compute dtype on the VPU in-kernel)
    # w1:    [D, H]  compute dtype      b1: [1, H]  f32
    # w2:    [H, Ep] compute dtype      b2: [1, Ep] f32   (Ep % 128 == 0)
    # o_ref: [B, Ep] f32, lane-dense store
    x = x_ref[...].astype(w1.dtype)
    h = jnp.dot(x, w1, preferred_element_type=jnp.float32)
    h = jnp.maximum(h + b1, 0.0)          # bias + ReLU on the f32 accumulator
    h = h.astype(w2.dtype)                # back to compute dtype for the MXU
    out = jnp.dot(h, w2, preferred_element_type=jnp.float32)
    o_ref[...] = (out + b2).astype(o_ref.dtype)


def _triplet_kernel(x1_ref, x2_ref, x3_ref, w1_ref, b1_ref, w2_ref, b2_ref,
                    o1_ref, o2_ref, o3_ref):
    # Load the shared weights from VMEM once; reuse for all three embeddings.
    w1 = w1_ref[...]
    b1 = b1_ref[...]
    w2 = w2_ref[...]
    b2 = b2_ref[...]
    _embed_body(x1_ref, w1, b1, w2, b2, o1_ref)
    _embed_body(x2_ref, w1, b1, w2, b2, o2_ref)
    _embed_body(x3_ref, w1, b1, w2, b2, o3_ref)


def _single_kernel(x_ref, w1_ref, b1_ref, w2_ref, b2_ref, o_ref):
    _embed_body(x_ref, w1_ref[...], b1_ref[...], w2_ref[...], b2_ref[...], o_ref)


# -----------------------------------------------------------------------------
# One-time parameter preparation (hoisted out of the per-call hot path)
# -----------------------------------------------------------------------------
class PreparedParams(NamedTuple):
    w1: jax.Array     # [D, H]   compute dtype
    b1: jax.Array     # [1, H]   f32
    w2: jax.Array     # [H, Ep]  compute dtype, Ep % 128 == 0
    b2: jax.Array     # [1, Ep]  f32
    embed_dim: int    # true E (static)


def prepare_params(params, compute_dtype=jnp.bfloat16):
    """Cast/pad the embedding-net weights once, at init time."""
    w1, b1, w2, b2 = params
    H, E = w2.shape
    Ep = max(_round_up(E, _LANE), _LANE)
    w1_c = jnp.asarray(w1, compute_dtype)
    b1_c = jnp.asarray(b1, jnp.float32).reshape(1, -1)
    w2_p = jnp.zeros((H, Ep), compute_dtype).at[:, :E].set(
        jnp.asarray(w2, compute_dtype))
    b2_p = jnp.zeros((1, Ep), jnp.float32).at[:, :E].set(
        jnp.asarray(b2, jnp.float32).reshape(1, -1))
    return PreparedParams(w1=w1_c, b1=b1_c, w2=w2_p, b2=b2_p, embed_dim=E)


def _cost_estimate(n_inputs, B, D, H, Ep, x_itemsize, w_bytes):
    flops = n_inputs * (2 * B * D * H + 2 * B * H * Ep)
    bytes_accessed = n_inputs * B * D * x_itemsize + w_bytes + n_inputs * B * Ep * 4
    return pl.CostEstimate(flops=flops, transcendentals=0,
                           bytes_accessed=bytes_accessed)


# -----------------------------------------------------------------------------
# Jitted forward paths (separate cached callables for triplet / single input)
# -----------------------------------------------------------------------------
@functools.partial(jax.jit, static_argnames=("embed_dim",))
def _triplet_forward(w1, b1, w2, b2, x1, x2, x3, *, embed_dim):
    B = x1.shape[0]
    D, H = w1.shape
    Ep = w2.shape[1]
    x1f = x1.reshape(B, -1)               # row-major flatten (matches torch .view)
    x2f = x2.reshape(B, -1)
    x3f = x3.reshape(B, -1)
    w_bytes = (w1.size * w1.dtype.itemsize + b1.size * 4
               + w2.size * w2.dtype.itemsize + b2.size * 4)
    cost = _cost_estimate(3, B, D, H, Ep, x1f.dtype.itemsize, w_bytes)
    o1, o2, o3 = pl.pallas_call(
        _triplet_kernel,
        out_shape=tuple(jax.ShapeDtypeStruct((B, Ep), jnp.float32)
                        for _ in range(3)),
        in_specs=[_VMEM] * 7,
        out_specs=(_VMEM, _VMEM, _VMEM),
        cost_estimate=cost,
    )(x1f, x2f, x3f, w1, b1, w2, b2)
    return o1[:, :embed_dim], o2[:, :embed_dim], o3[:, :embed_dim]


@functools.partial(jax.jit, static_argnames=("embed_dim",))
def _single_forward(w1, b1, w2, b2, x, *, embed_dim):
    B = x.shape[0]
    D, H = w1.shape
    Ep = w2.shape[1]
    xf = x.reshape(B, -1)
    w_bytes = (w1.size * w1.dtype.itemsize + b1.size * 4
               + w2.size * w2.dtype.itemsize + b2.size * 4)
    cost = _cost_estimate(1, B, D, H, Ep, xf.dtype.itemsize, w_bytes)
    o = pl.pallas_call(
        _single_kernel,
        out_shape=jax.ShapeDtypeStruct((B, Ep), jnp.float32),
        in_specs=[_VMEM] * 5,
        out_specs=_VMEM,
        cost_estimate=cost,
    )(xf, w1, b1, w2, b2)
    return o[:, :embed_dim]


def triplet_net_forward(prepared: PreparedParams, x1, x2=None, x3=None):
    """Mirrors TripletNet.forward semantics exactly."""
    w1, b1, w2, b2, embed_dim = prepared
    if x2 is None and x3 is None:
        return _single_forward(w1, b1, w2, b2, x1, embed_dim=embed_dim)
    return _triplet_forward(w1, b1, w2, b2, x1, x2, x3, embed_dim=embed_dim)


def init_params(key, in_dim, hidden_dim, embed_dim):
    k1, k2, k3, k4 = jax.random.split(key, 4)
    w1 = jax.random.normal(k1, (in_dim, hidden_dim), jnp.float32) * 0.02
    b1 = jax.random.normal(k2, (1, hidden_dim), jnp.float32) * 0.02
    w2 = jax.random.normal(k3, (hidden_dim, embed_dim), jnp.float32) * 0.02
    b2 = jax.random.normal(k4, (1, embed_dim), jnp.float32) * 0.02
    return (w1, b1, w2, b2)


if __name__ == "__main__":
    # Small shapes: batch=2, channels=4, spatial=16x16 (NCHW, like PyTorch).
    B, C, Himg, Wimg = 2, 4, 16, 16
    D = C * Himg * Wimg        # 1024 flattened features
    HIDDEN = 32
    EMBED = 16

    key = jax.random.PRNGKey(0)
    kp, k1, k2, k3 = jax.random.split(key, 4)

    params = init_params(kp, D, HIDDEN, EMBED)
    x1 = jax.random.normal(k1, (B, C, Himg, Wimg), jnp.float32)
    x2 = jax.random.normal(k2, (B, C, Himg, Wimg), jnp.float32)
    x3 = jax.random.normal(k3, (B, C, Himg, Wimg), jnp.float32)

    def ref_embed(x, dtype):
        w1, b1, w2, b2 = params
        xf = x.reshape(x.shape[0], -1).astype(dtype)
        h = jnp.dot(xf, w1.astype(dtype), preferred_element_type=jnp.float32)
        h = jnp.maximum(h + b1, 0.0)
        out = jnp.dot(h.astype(dtype), w2.astype(dtype),
                      preferred_element_type=jnp.float32)
        return out + b2

    # --- bf16 compute path (default; fast path on v6e/v7x) -----------------
    prepared_bf16 = prepare_params(params, jnp.bfloat16)   # one-time prep
    e1, e2, e3 = triplet_net_forward(prepared_bf16, x1, x2, x3)
    jax.block_until_ready((e1, e2, e3))
    assert e1.shape == (B, EMBED) and e2.shape == (B, EMBED) and e3.shape == (B, EMBED)
    assert jnp.allclose(e1, ref_embed(x1, jnp.bfloat16), atol=2e-2, rtol=2e-2)
    assert jnp.allclose(e2, ref_embed(x2, jnp.bfloat16), atol=2e-2, rtol=2e-2)
    assert jnp.allclose(e3, ref_embed(x3, jnp.bfloat16), atol=2e-2, rtol=2e-2)

    # Single-input path (x2 is None and x3 is None): returns one embedding.
    # (Intentionally a separate cached jit/Mosaic compilation.)
    e_single = triplet_net_forward(prepared_bf16, x1)
    jax.block_until_ready(e_single)
    assert e_single.shape == (B, EMBED)
    assert jnp.allclose(e_single, e1, atol=1e-5)

    # --- f32 compute path (PyTorch-semantics check, same jnp.dot lowering) --
    prepared_f32 = prepare_params(params, jnp.float32)
    f1, f2, f3 = triplet_net_forward(prepared_f32, x1, x2, x3)
    jax.block_until_ready((f1, f2, f3))
    assert jnp.allclose(f1, ref_embed(x1, jnp.float32), atol=1e-5)
    assert jnp.allclose(f2, ref_embed(x2, jnp.float32), atol=1e-5)
    assert jnp.allclose(f3, ref_embed(x3, jnp.float32), atol=1e-5)

    print("KERNEL_OK")
</pallas_src>

<mosaic_0001>
module attributes {stable_mosaic.version = 11 : i64} {
  func.func @_triplet_kernel(%arg0: memref<2x1024xf32, #tpu.memory_space<vmem>>, %arg1: memref<2x1024xf32, #tpu.memory_space<vmem>>, %arg2: memref<2x1024xf32, #tpu.memory_space<vmem>>, %arg3: memref<1024x32xbf16, #tpu.memory_space<vmem>>, %arg4: memref<1x32xf32, #tpu.memory_space<vmem>>, %arg5: memref<32x128xbf16, #tpu.memory_space<vmem>>, %arg6: memref<1x128xf32, #tpu.memory_space<vmem>>, %arg7: memref<2x128xf32, #tpu.memory_space<vmem>>, %arg8: memref<2x128xf32, #tpu.memory_space<vmem>>, %arg9: memref<2x128xf32, #tpu.memory_space<vmem>>) attributes {dimension_semantics = [], scalar_prefetch = 0 : i64, scratch_operands = 0 : i64, tpu.core_type = #tpu.core_type<tc>} {
    %c0 = arith.constant 0 : index
    %c0_0 = arith.constant 0 : index
    %0 = vector.load %arg3[%c0, %c0_0] : memref<1024x32xbf16, #tpu.memory_space<vmem>>, vector<1024x32xbf16>
    %c0_1 = arith.constant 0 : index
    %c0_2 = arith.constant 0 : index
    %1 = vector.load %arg4[%c0_1, %c0_2] : memref<1x32xf32, #tpu.memory_space<vmem>>, vector<1x32xf32>
    %c0_3 = arith.constant 0 : index
    %c0_4 = arith.constant 0 : index
    %2 = vector.load %arg5[%c0_3, %c0_4] : memref<32x128xbf16, #tpu.memory_space<vmem>>, vector<32x128xbf16>
    %c0_5 = arith.constant 0 : index
    %c0_6 = arith.constant 0 : index
    %3 = vector.load %arg6[%c0_5, %c0_6] : memref<1x128xf32, #tpu.memory_space<vmem>>, vector<1x128xf32>
    %c0_7 = arith.constant 0 : index
    %c0_8 = arith.constant 0 : index
    %4 = vector.load %arg0[%c0_7, %c0_8] : memref<2x1024xf32, #tpu.memory_space<vmem>>, vector<2x1024xf32>
    %5 = arith.truncf %4 : vector<2x1024xf32> to vector<2x1024xbf16>
    %cst = arith.constant dense<0.000000e+00> : vector<2x32xf32>
    %6 = tpu.matmul %5, %0, %cst {dimension_numbers = #tpu.dot_dimension_numbers<[1], [0], [0], [1], [0, 0, 1, 1], [], []>} : vector<2x1024xbf16>, vector<1024x32xbf16>, vector<2x32xf32> -> vector<2x32xf32>
    %7 = vector.broadcast %1 : vector<1x32xf32> to vector<2x32xf32>
    %8 = arith.addf %6, %7 : vector<2x32xf32>
    %cst_9 = arith.constant 0.000000e+00 : f32
    %9 = vector.broadcast %cst_9 : f32 to vector<2x32xf32>
    %10 = arith.maximumf %8, %9 : vector<2x32xf32>
    %11 = arith.truncf %10 : vector<2x32xf32> to vector<2x32xbf16>
    %cst_10 = arith.constant dense<0.000000e+00> : vector<2x128xf32>
    %12 = tpu.matmul %11, %2, %cst_10 {dimension_numbers = #tpu.dot_dimension_numbers<[1], [0], [0], [1], [0, 0, 1, 1], [], []>} : vector<2x32xbf16>, vector<32x128xbf16>, vector<2x128xf32> -> vector<2x128xf32>
    %13 = vector.broadcast %3 : vector<1x128xf32> to vector<2x128xf32>
    %14 = arith.addf %12, %13 : vector<2x128xf32>
    %c0_11 = arith.constant 0 : index
    %c0_12 = arith.constant 0 : index
    %15 = vector.load %arg7[%c0_11, %c0_12] : memref<2x128xf32, #tpu.memory_space<vmem>>, vector<2x128xf32>
    tpu.vector_store %arg7[%c0_11, %c0_12], %14 {strides = array<i32>} : memref<2x128xf32, #tpu.memory_space<vmem>>, vector<2x128xf32>,
    %c0_13 = arith.constant 0 : index
    %c0_14 = arith.constant 0 : index
    %16 = vector.load %arg1[%c0_13, %c0_14] : memref<2x1024xf32, #tpu.memory_space<vmem>>, vector<2x1024xf32>
    %17 = arith.truncf %16 : vector<2x1024xf32> to vector<2x1024xbf16>
    %cst_15 = arith.constant dense<0.000000e+00> : vector<2x32xf32>
    %18 = tpu.matmul %17, %0, %cst_15 {dimension_numbers = #tpu.dot_dimension_numbers<[1], [0], [0], [1], [0, 0, 1, 1], [], []>} : vector<2x1024xbf16>, vector<1024x32xbf16>, vector<2x32xf32> -> vector<2x32xf32>
    %19 = vector.broadcast %1 : vector<1x32xf32> to vector<2x32xf32>
    %20 = arith.addf %18, %19 : vector<2x32xf32>
    %cst_16 = arith.constant 0.000000e+00 : f32
    %21 = vector.broadcast %cst_16 : f32 to vector<2x32xf32>
    %22 = arith.maximumf %20, %21 : vector<2x32xf32>
    %23 = arith.truncf %22 : vector<2x32xf32> to vector<2x32xbf16>
    %cst_17 = arith.constant dense<0.000000e+00> : vector<2x128xf32>
    %24 = tpu.matmul %23, %2, %cst_17 {dimension_numbers = #tpu.dot_dimension_numbers<[1], [0], [0], [1], [0, 0, 1, 1], [], []>} : vector<2x32xbf16>, vector<32x128xbf16>, vector<2x128xf32> -> vector<2x128xf32>
    %25 = vector.broadcast %3 : vector<1x128xf32> to vector<2x128xf32>
    %26 = arith.addf %24, %25 : vector<2x128xf32>
    %c0_18 = arith.constant 0 : index
    %c0_19 = arith.constant 0 : index
    %27 = vector.load %arg8[%c0_18, %c0_19] : memref<2x128xf32, #tpu.memory_space<vmem>>, vector<2x128xf32>
    tpu.vector_store %arg8[%c0_18, %c0_19], %26 {strides = array<i32>} : memref<2x128xf32, #tpu.memory_space<vmem>>, vector<2x128xf32>,
    %c0_20 = arith.constant 0 : index
    %c0_21 = arith.constant 0 : index
    %28 = vector.load %arg2[%c0_20, %c0_21] : memref<2x1024xf32, #tpu.memory_space<vmem>>, vector<2x1024xf32>
    %29 = arith.truncf %28 : vector<2x1024xf32> to vector<2x1024xbf16>
    %cst_22 = arith.constant dense<0.000000e+00> : vector<2x32xf32>
    %30 = tpu.matmul %29, %0, %cst_22 {dimension_numbers = #tpu.dot_dimension_numbers<[1], [0], [0], [1], [0, 0, 1, 1], [], []>} : vector<2x1024xbf16>, vector<1024x32xbf16>, vector<2x32xf32> -> vector<2x32xf32>
    %31 = vector.broadcast %1 : vector<1x32xf32> to vector<2x32xf32>
    %32 = arith.addf %30, %31 : vector<2x32xf32>
    %cst_23 = arith.constant 0.000000e+00 : f32
    %33 = vector.broadcast %cst_23 : f32 to vector<2x32xf32>
    %34 = arith.maximumf %32, %33 : vector<2x32xf32>
    %35 = arith.truncf %34 : vector<2x32xf32> to vector<2x32xbf16>
    %cst_24 = arith.constant dense<0.000000e+00> : vector<2x128xf32>
    %36 = tpu.matmul %35, %2, %cst_24 {dimension_numbers = #tpu.dot_dimension_numbers<[1], [0], [0], [1], [0, 0, 1, 1], [], []>} : vector<2x32xbf16>, vector<32x128xbf16>, vector<2x128xf32> -> vector<2x128xf32>
    %37 = vector.broadcast %3 : vector<1x128xf32> to vector<2x128xf32>
    %38 = arith.addf %36, %37 : vector<2x128xf32>
    %c0_25 = arith.constant 0 : index
    %c0_26 = arith.constant 0 : index
    %39 = vector.load %arg9[%c0_25, %c0_26] : memref<2x128xf32, #tpu.memory_space<vmem>>, vector<2x128xf32>
    tpu.vector_store %arg9[%c0_25, %c0_26], %38 {strides = array<i32>} : memref<2x128xf32, #tpu.memory_space<vmem>>, vector<2x128xf32>,
    return
  }
}

</mosaic_0001>

<llo_original>
// kernel: _triplet_forward.1
$region0: #{_triplet_forward.1}
  #allocation0 [shape = 'u32[]', space=smem, size = 0x4, offset = 0x4, fixed_abs, tag = 'smem constant byte address 0x4 - core index']
  #allocation1 [shape = 'u32[144,128]{1,0:T(1,128)}', space=vmem, size = 0x12000, scoped, tag = 'internal scratch']
  %s0 = inlined_call_operand.vmem [shape: f32[2,1024], index: 0, kind: input, shape index: {}]
  %s1 = inlined_call_operand.vmem [shape: f32[2,1024], index: 1, kind: input, shape index: {}]
  %s2 = inlined_call_operand.vmem [shape: f32[2,1024], index: 2, kind: input, shape index: {}]
  %s3 = inlined_call_operand.vmem [shape: bf16[1024,32], index: 3, kind: input, shape index: {}]
  %s4 = inlined_call_operand.vmem [shape: f32[1,32], index: 4, kind: input, shape index: {}]
  %s5 = inlined_call_operand.vmem [shape: bf16[32,128], index: 5, kind: input, shape index: {}]
  %s6 = inlined_call_operand.vmem [shape: f32[1,128], index: 6, kind: input, shape index: {}]
  %s7 = inlined_call_operand.hbm [shape: f32[2,128], index: 7, kind: output, shape index: {0}]
  %s8 = inlined_call_operand.hbm [shape: f32[2,128], index: 8, kind: output, shape index: {1}]
  %s9 = inlined_call_operand.hbm [shape: f32[2,128], index: 9, kind: output, shape index: {2}]
  %10 = xla_tuple %s7, %s8, %s9
  %s11 = sld [smem:[#allocation0]]
  $region54: #{_triplet_forward.1} parent=0
    _
  %s13 = ssub.s32 1, %s11
  %s14 = scalar_select 0, %s13, %s11
  $region1: #{_triplet_forward.1} parent=0
    #allocation2 [shape = 'u8[1024]{0}', space=vmem, size = 0x400, scoped, tag = 'output window, operand 0, single buffered']
    #allocation3 [shape = 's32[1]{0}', space=sflag, size = 0x4, scoped, tag = 'scoped memory for _triplet_forward.1']
    #allocation4 [shape = 'u8[1024]{0}', space=vmem, size = 0x400, scoped, tag = 'output window, operand 1, single buffered']
    #allocation5 [shape = 's32[1]{0}', space=sflag, size = 0x4, scoped, tag = 'scoped memory for _triplet_forward.1']
    #allocation6 [shape = 'u8[1024]{0}', space=vmem, size = 0x400, scoped, tag = 'output window, operand 2, single buffered']
    %15 = vsyncpa [#allocation3], 0
    %16 = vsyncpa [#allocation5], 0
    // Predicated region
    $region2: #{_triplet_forward.1} parent=1 // pred_check
      _
    $region3: #{_triplet_forward.1} parent=1 // pred_check_branch
      %18 = sbr.rel (0) target = $region5
    $region4: #{_triplet_forward.1} parent=1 // pred_region
      _
    $region5: #{_triplet_forward.1} parent=1 // pred_fallthru
      _
    // Predicated region
    $region6: #{_triplet_forward.1} parent=1 // pred_check
      _
    $region7: #{_triplet_forward.1} parent=1 // pred_check_branch
      %20 = sbr.rel (0) target = $region9
    $region8: #{_triplet_forward.1} parent=1 // pred_region
      _
    $region9: #{_triplet_forward.1} parent=1 // pred_fallthru
      _
    // Predicated region
    $region10: #{_triplet_forward.1} parent=1 // pred_check
      _
    $region11: #{_triplet_forward.1} parent=1 // pred_check_branch
      %22 = sbr.rel (0) target = $region13
    $region12: #{_triplet_forward.1} parent=1 // pred_region
      _
    $region13: #{_triplet_forward.1} parent=1 // pred_fallthru
      _
    // Predicated region
    $region14: #{_triplet_forward.1} parent=1 // pred_check
      _
    $region15: #{_triplet_forward.1} parent=1 // pred_check_branch
      %24 = sbr.rel (0) target = $region17
    $region16: #{_triplet_forward.1} parent=1 // pred_region
      _
    $region17: #{_triplet_forward.1} parent=1 // pred_fallthru
      _
    // Predicated region
    $region18: #{_triplet_forward.1} parent=1 // pred_check
      _
    $region19: #{_triplet_forward.1} parent=1 // pred_check_branch
      %26 = sbr.rel (0) target = $region21
    $region20: #{_triplet_forward.1} parent=1 // pred_region
      _
    $region21: #{_triplet_forward.1} parent=1 // pred_fallthru
      _
    // Predicated region
    $region22: #{_triplet_forward.1} parent=1 // pred_check
      _
    $region23: #{_triplet_forward.1} parent=1 // pred_check_branch
      %28 = sbr.rel (0) target = $region25
    $region24: #{_triplet_forward.1} parent=1 // pred_region
      _
    $region25: #{_triplet_forward.1} parent=1 // pred_fallthru
      _
    // Predicated region
    $region26: #{_triplet_forward.1} parent=1 // pred_check
      _
    $region27: #{_triplet_forward.1} parent=1 // pred_check_branch
      %30 = sbr.rel (0) target = $region29
    $region28: #{_triplet_forward.1} parent=1 // pred_region
      _
    $region29: #{_triplet_forward.1} parent=1 // pred_fallthru
      _
    %v32 = vld [vmem:[%s3] sm:$0xf]
    %v33 = vld [vmem:[%s3 + $0x4] sm:$0xf]
    %v34 = vld [vmem:[%s3 + $0x8] sm:$0xf]
    %v35 = vld [vmem:[%s3 + $0xc] sm:$0xf]
    %v36 = vld [vmem:[%s3 + $0x10] sm:$0xf]
    %v37 = vld [vmem:[%s3 + $0x14] sm:$0xf]
    %v38 = vld [vmem:[%s3 + $0x18] sm:$0xf]
    %v39 = vld [vmem:[%s3 + $0x1c] sm:$0xf]
    %v40 = vld [vmem:[%s3 + $0x20] sm:$0xf]
    %v41 = vld [vmem:[%s3 + $0x24] sm:$0xf]
    %v42 = vld [vmem:[%s3 + $0x28] sm:$0xf]
    %v43 = vld [vmem:[%s3 + $0x2c] sm:$0xf]
    %v44 = vld [vmem:[%s3 + $0x30] sm:$0xf]
    %v45 = vld [vmem:[%s3 + $0x34] sm:$0xf]
    %v46 = vld [vmem:[%s3 + $0x38] sm:$0xf]
    %v47 = vld [vmem:[%s3 + $0x3c] sm:$0xf]
    %v48 = vld [vmem:[%s3 + $0x40] sm:$0xf]
    %v49 = vld [vmem:[%s3 + $0x44] sm:$0xf]
    %v50 = vld [vmem:[%s3 + $0x48] sm:$0xf]
    %v51 = vld [vmem:[%s3 + $0x4c] sm:$0xf]
    %v52 = vld [vmem:[%s3 + $0x50] sm:$0xf]
    %v53 = vld [vmem:[%s3 + $0x54] sm:$0xf]
    %v54 = vld [vmem:[%s3 + $0x58] sm:$0xf]
    %v55 = vld [vmem:[%s3 + $0x5c] sm:$0xf]
    %v56 = vld [vmem:[%s3 + $0x60] sm:$0xf]
    %v57 = vld [vmem:[%s3 + $0x64] sm:$0xf]
    %v58 = vld [vmem:[%s3 + $0x68] sm:$0xf]
    %v59 = vld [vmem:[%s3 + $0x6c] sm:$0xf]
    %v60 = vld [vmem:[%s3 + $0x70] sm:$0xf]
    %v61 = vld [vmem:[%s3 + $0x74] sm:$0xf]
    %v62 = vld [vmem:[%s3 + $0x78] sm:$0xf]
    %v63 = vld [vmem:[%s3 + $0x7c] sm:$0xf]
    %v64 = vld [vmem:[%s3 + $0x80] sm:$0xf]
    %v65 = vld [vmem:[%s3 + $0x84] sm:$0xf]
    %v66 = vld [vmem:[%s3 + $0x88] sm:$0xf]
    %v67 = vld [vmem:[%s3 + $0x8c] sm:$0xf]
    %v68 = vld [vmem:[%s3 + $0x90] sm:$0xf]
    %v69 = vld [vmem:[%s3 + $0x94] sm:$0xf]
    %v70 = vld [vmem:[%s3 + $0x98] sm:$0xf]
    %v71 = vld [vmem:[%s3 + $0x9c] sm:$0xf]
    %v72 = vld [vmem:[%s3 + $0xa0] sm:$0xf]
    %v73 = vld [vmem:[%s3 + $0xa4] sm:$0xf]
    %v74 = vld [vmem:[%s3 + $0xa8] sm:$0xf]
    %v75 = vld [vmem:[%s3 + $0xac] sm:$0xf]
    %v76 = vld [vmem:[%s3 + $0xb0] sm:$0xf]
    %v77 = vld [vmem:[%s3 + $0xb4] sm:$0xf]
    %v78 = vld [vmem:[%s3 + $0xb8] sm:$0xf]
    %v79 = vld [vmem:[%s3 + $0xbc] sm:$0xf]
    %v80 = vld [vmem:[%s3 + $0xc0] sm:$0xf]
    %v81 = vld [vmem:[%s3 + $0xc4] sm:$0xf]
    %v82 = vld [vmem:[%s3 + $0xc8] sm:$0xf]
    %v83 = vld [vmem:[%s3 + $0xcc] sm:$0xf]
    %v84 = vld [vmem:[%s3 + $0xd0] sm:$0xf]
    %v85 = vld [vmem:[%s3 + $0xd4] sm:$0xf]
    %v86 = vld [vmem:[%s3 + $0xd8] sm:$0xf]
    %v87 = vld [vmem:[%s3 + $0xdc] sm:$0xf]
    %v88 = vld [vmem:[%s3 + $0xe0] sm:$0xf]
    %v89 = vld [vmem:[%s3 + $0xe4] sm:$0xf]
    %v90 = vld [vmem:[%s3 + $0xe8] sm:$0xf]
    %v91 = vld [vmem:[%s3 + $0xec] sm:$0xf]
    %v92 = vld [vmem:[%s3 + $0xf0] sm:$0xf]
    %v93 = vld [vmem:[%s3 + $0xf4] sm:$0xf]
    %v94 = vld [vmem:[%s3 + $0xf8] sm:$0xf]
    %v95 = vld [vmem:[%s3 + $0xfc] sm:$0xf]
    %v96 = vld [vmem:[%s3 + $0x100] sm:$0xf]
    %v97 = vld [vmem:[%s3 + $0x104] sm:$0xf]
    %v98 = vld [vmem:[%s3 + $0x108] sm:$0xf]
    %v99 = vld [vmem:[%s3 + $0x10c] sm:$0xf]
    %v100 = vld [vmem:[%s3 + $0x110] sm:$0xf]
    %v101 = vld [vmem:[%s3 + $0x114] sm:$0xf]
    %v102 = vld [vmem:[%s3 + $0x118] sm:$0xf]
    %v103 = vld [vmem:[%s3 + $0x11c] sm:$0xf]
    %v104 = vld [vmem:[%s3 + $0x120] sm:$0xf]
    %v105 = vld [vmem:[%s3 + $0x124] sm:$0xf]
    %v106 = vld [vmem:[%s3 + $0x128] sm:$0xf]
    %v107 = vld [vmem:[%s3 + $0x12c] sm:$0xf]
    %v108 = vld [vmem:[%s3 + $0x130] sm:$0xf]
    %v109 = vld [vmem:[%s3 + $0x134] sm:$0xf]
    %v110 = vld [vmem:[%s3 + $0x138] sm:$0xf]
    %v111 = vld [vmem:[%s3 + $0x13c] sm:$0xf]
    %v112 = vld [vmem:[%s3 + $0x140] sm:$0xf]
    %v113 = vld [vmem:[%s3 + $0x144] sm:$0xf]
    %v114 = vld [vmem:[%s3 + $0x148] sm:$0xf]
    %v115 = vld [vmem:[%s3 + $0x14c] sm:$0xf]
    %v116 = vld [vmem:[%s3 + $0x150] sm:$0xf]
    %v117 = vld [vmem:[%s3 + $0x154] sm:$0xf]
    %v118 = vld [vmem:[%s3 + $0x158] sm:$0xf]
    %v119 = vld [vmem:[%s3 + $0x15c] sm:$0xf]
    %v120 = vld [vmem:[%s3 + $0x160] sm:$0xf]
    %v121 = vld [vmem:[%s3 + $0x164] sm:$0xf]
    %v122 = vld [vmem:[%s3 + $0x168] sm:$0xf]
    %v123 = vld [vmem:[%s3 + $0x16c] sm:$0xf]
    %v124 = vld [vmem:[%s3 + $0x170] sm:$0xf]
    %v125 = vld [vmem:[%s3 + $0x174] sm:$0xf]
    %v126 = vld [vmem:[%s3 + $0x178] sm:$0xf]
    %v127 = vld [vmem:[%s3 + $0x17c] sm:$0xf]
    %v128 = vld [vmem:[%s3 + $0x180] sm:$0xf]
    %v129 = vld [vmem:[%s3 + $0x184] sm:$0xf]
    %v130 = vld [vmem:[%s3 + $0x188] sm:$0xf]
    %v131 = vld [vmem:[%s3 + $0x18c] sm:$0xf]
    %v132 = vld [vmem:[%s3 + $0x190] sm:$0xf]
    %v133 = vld [vmem:[%s3 + $0x194] sm:$0xf]
    %v134 = vld [vmem:[%s3 + $0x198] sm:$0xf]
    %v135 = vld [vmem:[%s3 + $0x19c] sm:$0xf]
    %v136 = vld [vmem:[%s3 + $0x1a0] sm:$0xf]
    %v137 = vld [vmem:[%s3 + $0x1a4] sm:$0xf]
    %v138 = vld [vmem:[%s3 + $0x1a8] sm:$0xf]
    %v139 = vld [vmem:[%s3 + $0x1ac] sm:$0xf]
    %v140 = vld [vmem:[%s3 + $0x1b0] sm:$0xf]
    %v141 = vld [vmem:[%s3 + $0x1b4] sm:$0xf]
    %v142 = vld [vmem:[%s3 + $0x1b8] sm:$0xf]
    %v143 = vld [vmem:[%s3 + $0x1bc] sm:$0xf]
    %v144 = vld [vmem:[%s3 + $0x1c0] sm:$0xf]
    %v145 = vld [vmem:[%s3 + $0x1c4] sm:$0xf]
    %v146 = vld [vmem:[%s3 + $0x1c8] sm:$0xf]
    %v147 = vld [vmem:[%s3 + $0x1cc] sm:$0xf]
    %v148 = vld [vmem:[%s3 + $0x1d0] sm:$0xf]
    %v149 = vld [vmem:[%s3 + $0x1d4] sm:$0xf]
    %v150 = vld [vmem:[%s3 + $0x1d8] sm:$0xf]
    %v151 = vld [vmem:[%s3 + $0x1dc] sm:$0xf]
    %v152 = vld [vmem:[%s3 + $0x1e0] sm:$0xf]
    %v153 = vld [vmem:[%s3 + $0x1e4] sm:$0xf]
    %v154 = vld [vmem:[%s3 + $0x1e8] sm:$0xf]
    %v155 = vld [vmem:[%s3 + $0x1ec] sm:$0xf]
    %v156 = vld [vmem:[%s3 + $0x1f0] sm:$0xf]
    %v157 = vld [vmem:[%s3 + $0x1f4] sm:$0xf]
    %v158 = vld [vmem:[%s3 + $0x1f8] sm:$0xf]
    %v159 = vld [vmem:[%s3 + $0x1fc] sm:$0xf]
    %v160 = vld [vmem:[%s4] sm:$0x1]
    %v161 = vld [vmem:[%s5] sm:$0xf]
    %v162 = vld [vmem:[%s5 + $0x4] sm:$0xf]
    %v163 = vld [vmem:[%s5 + $0x8] sm:$0xf]
    %v164 = vld [vmem:[%s5 + $0xc] sm:$0xf]
    %v165 = vld [vmem:[%s6] sm:$0x1]
    %v166 = vld [vmem:[%s0] sm:$0xff]
    %v167 = vld [vmem:[%s0 + $0x8] sm:$0xff]
    %v170 = vcombine.high %v166, %v166
    %v172 = vunpack.c.l.s4 1983009808
    %v173 = vunpack.c.0.s8 %v172
    %v174 = vlaneseq
    %v175 = vshrl.u32 %v174, 7
    %v176 = vsub.s32 %v173, %v175
    %v177 = vrot.slane %v166, %v176
    %v179 = vunpack.c.l.s4 1983009808
    %v180 = vunpack.c.0.s8 %v179
    %v181 = vlaneseq
    %v182 = vshrl.u32 %v181, 7
    %v183 = vsub.s32 %v180, %v182
    %v184 = vrot.slane %v170, %v183
    %v185 = vcombine.high %v177, %v177
    %v186 = vcombine.high %v184, %v184
    %v187 = vcombine.high %v167, %v167
    %v189 = vunpack.c.l.s4 1983009808
    %v190 = vunpack.c.0.s8 %v189
    %v191 = vlaneseq
    %v192 = vshrl.u32 %v191, 7
    %v193 = vsub.s32 %v190, %v192
    %v194 = vrot.slane %v167, %v193
    %v196 = vunpack.c.l.s4 1983009808
    %v197 = vunpack.c.0.s8 %v196
    %v198 = vlaneseq
    %v199 = vshrl.u32 %v198, 7
    %v200 = vsub.s32 %v197, %v199
    %v201 = vrot.slane %v187, %v200
    %v202 = vcombine.high %v194, %v194
    %v203 = vcombine.high %v201, %v201
    %v212 = vpack.c.bf16 %v177, %v177
    %v213 = vpack.c.bf16 %v185, %v185
    %v214 = vpack.c.bf16 %v184, %v184
    %v215 = vpack.c.bf16 %v186, %v186
    %v216 = vpack.c.bf16 %v194, %v194
    %v217 = vpack.c.bf16 %v202, %v202
    %v218 = vpack.c.bf16 %v201, %v201
    %v219 = vpack.c.bf16 %v203, %v203
    %v221 = vlaneseq
    %v222 = vshrl.u32 %v221, 7
    %v223 = vsub.s32 0, %v222
    %v224 = vrot.slane %v160, %v223
    %v354 = vunpack.c.l.b16 %v32
    %v355 = vunpack.c.l.b16 %v33
    %v356 = vunpack.c.l.b16 %v34
    %v357 = vunpack.c.l.b16 %v35
    %v358 = vunpack.c.l.b16 %v36
    %v359 = vunpack.c.l.b16 %v37
    %v360 = vunpack.c.l.b16 %v38
    %v361 = vunpack.c.l.b16 %v39
    %v362 = vunpack.c.l.b16 %v40
    %v363 = vunpack.c.l.b16 %v41
    %v364 = vunpack.c.l.b16 %v42
    %v365 = vunpack.c.l.b16 %v43
    %v366 = vunpack.c.l.b16 %v44
    %v367 = vunpack.c.l.b16 %v45
    %v368 = vunpack.c.l.b16 %v46
    %v369 = vunpack.c.l.b16 %v47
    %v370 = vunpack.c.l.b16 %v48
    %v371 = vunpack.c.l.b16 %v49
    %v372 = vunpack.c.l.b16 %v50
    %v373 = vunpack.c.l.b16 %v51
    %v374 = vunpack.c.l.b16 %v52
    %v375 = vunpack.c.l.b16 %v53
    %v376 = vunpack.c.l.b16 %v54
    %v377 = vunpack.c.l.b16 %v55
    %v378 = vunpack.c.l.b16 %v56
    %v379 = vunpack.c.l.b16 %v57
    %v380 = vunpack.c.l.b16 %v58
    %v381 = vunpack.c.l.b16 %v59
    %v382 = vunpack.c.l.b16 %v60
    %v383 = vunpack.c.l.b16 %v61
    %v384 = vunpack.c.l.b16 %v62
    %v385 = vunpack.c.l.b16 %v63
    %v386 = vunpack.c.l.b16 %v64
    %v387 = vunpack.c.l.b16 %v65
    %v388 = vunpack.c.l.b16 %v66
    %v389 = vunpack.c.l.b16 %v67
    %v390 = vunpack.c.l.b16 %v68
    %v391 = vunpack.c.l.b16 %v69
    %v392 = vunpack.c.l.b16 %v70
    %v393 = vunpack.c.l.b16 %v71
    %v394 = vunpack.c.l.b16 %v72
    %v395 = vunpack.c.l.b16 %v73
    %v396 = vunpack.c.l.b16 %v74
    %v397 = vunpack.c.l.b16 %v75
    %v398 = vunpack.c.l.b16 %v76
    %v399 = vunpack.c.l.b16 %v77
    %v400 = vunpack.c.l.b16 %v78
    %v401 = vunpack.c.l.b16 %v79
    %v402 = vunpack.c.l.b16 %v80
    %v403 = vunpack.c.l.b16 %v81
    %v404 = vunpack.c.l.b16 %v82
    %v405 = vunpack.c.l.b16 %v83
    %v406 = vunpack.c.l.b16 %v84
    %v407 = vunpack.c.l.b16 %v85
    %v408 = vunpack.c.l.b16 %v86
    %v409 = vunpack.c.l.b16 %v87
    %v410 = vunpack.c.l.b16 %v88
    %v411 = vunpack.c.l.b16 %v89
    %v412 = vunpack.c.l.b16 %v90
    %v413 = vunpack.c.l.b16 %v91
    %v414 = vunpack.c.l.b16 %v92
    %v415 = vunpack.c.l.b16 %v93
    %v416 = vunpack.c.l.b16 %v94
    %v417 = vunpack.c.l.b16 %v95
    %v418 = vunpack.c.l.b16 %v96
    %v419 = vunpack.c.l.b16 %v97
    %v420 = vunpack.c.l.b16 %v98
    %v421 = vunpack.c.l.b16 %v99
    %v422 = vunpack.c.l.b16 %v100
    %v423 = vunpack.c.l.b16 %v101
    %v424 = vunpack.c.l.b16 %v102
    %v425 = vunpack.c.l.b16 %v103
    %v426 = vunpack.c.l.b16 %v104
    %v427 = vunpack.c.l.b16 %v105
    %v428 = vunpack.c.l.b16 %v106
    %v429 = vunpack.c.l.b16 %v107
    %v430 = vunpack.c.l.b16 %v108
    %v431 = vunpack.c.l.b16 %v109
    %v432 = vunpack.c.l.b16 %v110
    %v433 = vunpack.c.l.b16 %v111
    %v434 = vunpack.c.l.b16 %v112
    %v435 = vunpack.c.l.b16 %v113
    %v436 = vunpack.c.l.b16 %v114
    %v437 = vunpack.c.l.b16 %v115
    %v438 = vunpack.c.l.b16 %v116
    %v439 = vunpack.c.l.b16 %v117
    %v440 = vunpack.c.l.b16 %v118
    %v441 = vunpack.c.l.b16 %v119
    %v442 = vunpack.c.l.b16 %v120
    %v443 = vunpack.c.l.b16 %v121
    %v444 = vunpack.c.l.b16 %v122
    %v445 = vunpack.c.l.b16 %v123
    %v446 = vunpack.c.l.b16 %v124
    %v447 = vunpack.c.l.b16 %v125
    %v448 = vunpack.c.l.b16 %v126
    %v449 = vunpack.c.l.b16 %v127
    %v450 = vunpack.c.l.b16 %v128
    %v451 = vunpack.c.l.b16 %v129
    %v452 = vunpack.c.l.b16 %v130
    %v453 = vunpack.c.l.b16 %v131
    %v454 = vunpack.c.l.b16 %v132
    %v455 = vunpack.c.l.b16 %v133
    %v456 = vunpack.c.l.b16 %v134
    %v457 = vunpack.c.l.b16 %v135
    %v458 = vunpack.c.l.b16 %v136
    %v459 = vunpack.c.l.b16 %v137
    %v460 = vunpack.c.l.b16 %v138
    %v461 = vunpack.c.l.b16 %v139
    %v462 = vunpack.c.l.b16 %v140
    %v463 = vunpack.c.l.b16 %v141
    %v464 = vunpack.c.l.b16 %v142
    %v465 = vunpack.c.l.b16 %v143
    %v466 = vunpack.c.l.b16 %v144
    %v467 = vunpack.c.l.b16 %v145
    %v468 = vunpack.c.l.b16 %v146
    %v469 = vunpack.c.l.b16 %v147
    %v470 = vunpack.c.l.b16 %v148
    %v471 = vunpack.c.l.b16 %v149
    %v472 = vunpack.c.l.b16 %v150
    %v473 = vunpack.c.l.b16 %v151
    %v474 = vunpack.c.l.b16 %v152
    %v475 = vunpack.c.l.b16 %v153
    %v476 = vunpack.c.l.b16 %v154
    %v477 = vunpack.c.l.b16 %v155
    %v478 = vunpack.c.l.b16 %v156
    %v479 = vunpack.c.l.b16 %v157
    %v480 = vunpack.c.l.b16 %v158
    %v481 = vunpack.c.l.b16 %v159
    %v482 = vpack.c.b16 %v355, %v354
    %v483 = vpack.c.b16 %v357, %v356
    %v484 = vpack.c.b16 %v359, %v358
    %v485 = vpack.c.b16 %v361, %v360
    %v486 = vpack.c.b16 %v363, %v362
    %v487 = vpack.c.b16 %v365, %v364
    %v488 = vpack.c.b16 %v367, %v366
    %v489 = vpack.c.b16 %v369, %v368
    %v490 = vpack.c.b16 %v371, %v370
    %v491 = vpack.c.b16 %v373, %v372
    %v492 = vpack.c.b16 %v375, %v374
    %v493 = vpack.c.b16 %v377, %v376
    %v494 = vpack.c.b16 %v379, %v378
    %v495 = vpack.c.b16 %v381, %v380
    %v496 = vpack.c.b16 %v383, %v382
    %v497 = vpack.c.b16 %v385, %v384
    %v498 = vpack.c.b16 %v387, %v386
    %v499 = vpack.c.b16 %v389, %v388
    %v500 = vpack.c.b16 %v391, %v390
    %v501 = vpack.c.b16 %v393, %v392
    %v502 = vpack.c.b16 %v395, %v394
    %v503 = vpack.c.b16 %v397, %v396
    %v504 = vpack.c.b16 %v399, %v398
    %v505 = vpack.c.b16 %v401, %v400
    %v506 = vpack.c.b16 %v403, %v402
    %v507 = vpack.c.b16 %v405, %v404
    %v508 = vpack.c.b16 %v407, %v406
    %v509 = vpack.c.b16 %v409, %v408
    %v510 = vpack.c.b16 %v411, %v410
    %v511 = vpack.c.b16 %v413, %v412
    %v512 = vpack.c.b16 %v415, %v414
    %v513 = vpack.c.b16 %v417, %v416
    %v514 = vpack.c.b16 %v419, %v418
    %v515 = vpack.c.b16 %v421, %v420
    %v516 = vpack.c.b16 %v423, %v422
    %v517 = vpack.c.b16 %v425, %v424
    %v518 = vpack.c.b16 %v427, %v426
    %v519 = vpack.c.b16 %v429, %v428
    %v520 = vpack.c.b16 %v431, %v430
    %v521 = vpack.c.b16 %v433, %v432
    %v522 = vpack.c.b16 %v435, %v434
    %v523 = vpack.c.b16 %v437, %v436
    %v524 = vpack.c.b16 %v439, %v438
    %v525 = vpack.c.b16 %v441, %v440
    %v526 = vpack.c.b16 %v443, %v442
    %v527 = vpack.c.b16 %v445, %v444
    %v528 = vpack.c.b16 %v447, %v446
    %v529 = vpack.c.b16 %v449, %v448
    %v530 = vpack.c.b16 %v451, %v450
    %v531 = vpack.c.b16 %v453, %v452
    %v532 = vpack.c.b16 %v455, %v454
    %v533 = vpack.c.b16 %v457, %v456
    %v534 = vpack.c.b16 %v459, %v458
    %v535 = vpack.c.b16 %v461, %v460
    %v536 = vpack.c.b16 %v463, %v462
    %v537 = vpack.c.b16 %v465, %v464
    %v538 = vpack.c.b16 %v467, %v466
    %v539 = vpack.c.b16 %v469, %v468
    %v540 = vpack.c.b16 %v471, %v470
    %v541 = vpack.c.b16 %v473, %v472
    %v542 = vpack.c.b16 %v475, %v474
    %v543 = vpack.c.b16 %v477, %v476
    %v544 = vpack.c.b16 %v479, %v478
    %v545 = vpack.c.b16 %v481, %v480
    %610 = vmatprep.subr.bf16.mxu0 0
    %611 = vmatpush1.bf16.msra.mxu0 %v482
    %612 = vmatprep.subr.bf16.mxu0 0
    %613 = vmatpush1.bf16.msra.mxu0 %v483
    %614 = vmatprep.subr.bf16.mxu0 0
    %615 = vmatpush1.bf16.msra.mxu0 %v484
    %616 = vmatprep.subr.bf16.mxu0 0
    %617 = vmatpush1.bf16.msra.mxu0 %v485
    %618 = vmatprep.subr.bf16.mxu0 0
    %619 = vmatpush1.bf16.msra.mxu0 %v486
    %620 = vmatprep.subr.bf16.mxu0 0
    %621 = vmatpush1.bf16.msra.mxu0 %v487
    %622 = vmatprep.subr.bf16.mxu0 0
    %623 = vmatpush1.bf16.msra.mxu0 %v488
    %624 = vmatprep.subr.bf16.mxu0 0
    %625 = vmatpush1.bf16.msra.mxu0 %v489
    %626 = vmatprep.subr.bf16.mxu0 0
    %627 = vmatpush1.bf16.msra.mxu0 %v490
    %628 = vmatprep.subr.bf16.mxu0 0
    %629 = vmatpush1.bf16.msra.mxu0 %v491
    %630 = vmatprep.subr.bf16.mxu0 0
    %631 = vmatpush1.bf16.msra.mxu0 %v492
    %632 = vmatprep.subr.bf16.mxu0 0
    %633 = vmatpush1.bf16.msra.mxu0 %v493
    %634 = vmatprep.subr.bf16.mxu0 0
    %635 = vmatpush1.bf16.msra.mxu0 %v494
    %636 = vmatprep.subr.bf16.mxu0 0
    %637 = vmatpush1.bf16.msra.mxu0 %v495
    %638 = vmatprep.subr.bf16.mxu0 0
    %639 = vmatpush1.bf16.msra.mxu0 %v496
    %640 = vmatprep.subr.bf16.mxu0 0
    %641 = vmatpush1.bf16.msra.mxu0 %v497
    %642 = vmatprep.mubr.bf16.mxu0 %v213
    %643 = vmatmul.mubr.bf16.gmra.mrb[0].mxu0 %v212
    %v644 = vpop.f32.mrb[0].mxu0
    %v645 = vadd.f32 %v224, %v644
    %v646 = vpop.f32.mrb[0].mxu0
    %v647 = vpop.f32.mrb[0].mxu0
    %v648 = vpop.f32.mrb[0].mxu0
    %649 = vdwg.mxu0
    %650 = vmatprep.subr.bf16.mxu0 0
    %651 = vmatpush1.bf16.msra.mxu0 %v498
    %652 = vmatprep.subr.bf16.mxu0 0
    %653 = vmatpush1.bf16.msra.mxu0 %v499
    %654 = vmatprep.subr.bf16.mxu0 0
    %655 = vmatpush1.bf16.msra.mxu0 %v500
    %656 = vmatprep.subr.bf16.mxu0 0
    %657 = vmatpush1.bf16.msra.mxu0 %v501
    %658 = vmatprep.subr.bf16.mxu0 0
    %659 = vmatpush1.bf16.msra.mxu0 %v502
    %660 = vmatprep.subr.bf16.mxu0 0
    %661 = vmatpush1.bf16.msra.mxu0 %v503
    %662 = vmatprep.subr.bf16.mxu0 0
    %663 = vmatpush1.bf16.msra.mxu0 %v504
    %664 = vmatprep.subr.bf16.mxu0 0
    %665 = vmatpush1.bf16.msra.mxu0 %v505
    %666 = vmatprep.subr.bf16.mxu0 0
    %667 = vmatpush1.bf16.msra.mxu0 %v506
    %668 = vmatprep.subr.bf16.mxu0 0
    %669 = vmatpush1.bf16.msra.mxu0 %v507
    %670 = vmatprep.subr.bf16.mxu0 0
    %671 = vmatpush1.bf16.msra.mxu0 %v508
    %672 = vmatprep.subr.bf16.mxu0 0
    %673 = vmatpush1.bf16.msra.mxu0 %v509
    %674 = vmatprep.subr.bf16.mxu0 0
    %675 = vmatpush1.bf16.msra.mxu0 %v510
    %676 = vmatprep.subr.bf16.mxu0 0
    %677 = vmatpush1.bf16.msra.mxu0 %v511
    %678 = vmatprep.subr.bf16.mxu0 0
    %679 = vmatpush1.bf16.msra.mxu0 %v512
    %680 = vmatprep.subr.bf16.mxu0 0
    %681 = vmatpush1.bf16.msra.mxu0 %v513
    %682 = vmatprep.mubr.bf16.mxu0 %v215
    %683 = vmatmul.mubr.bf16.gmra.mrb[0].mxu0 %v214
    %v684 = vpop.f32.mrb[0].mxu0
    %v685 = vadd.f32 %v645, %v684
    %v686 = vpop.f32.mrb[0].mxu0
    %v687 = vpop.f32.mrb[0].mxu0
    %v688 = vpop.f32.mrb[0].mxu0
    %689 = vdwg.mxu0
    %690 = vmatprep.subr.bf16.mxu0 0
    %691 = vmatpush1.bf16.msra.mxu0 %v514
    %692 = vmatprep.subr.bf16.mxu0 0
    %693 = vmatpush1.bf16.msra.mxu0 %v515
    %694 = vmatprep.subr.bf16.mxu0 0
    %695 = vmatpush1.bf16.msra.mxu0 %v516
    %696 = vmatprep.subr.bf16.mxu0 0
    %697 = vmatpush1.bf16.msra.mxu0 %v517
    %698 = vmatprep.subr.bf16.mxu0 0
    %699 = vmatpush1.bf16.msra.mxu0 %v518
    %700 = vmatprep.subr.bf16.mxu0 0
    %701 = vmatpush1.bf16.msra.mxu0 %v519
    %702 = vmatprep.subr.bf16.mxu0 0
    %703 = vmatpush1.bf16.msra.mxu0 %v520
    %704 = vmatprep.subr.bf16.mxu0 0
    %705 = vmatpush1.bf16.msra.mxu0 %v521
    %706 = vmatprep.subr.bf16.mxu0 0
    %707 = vmatpush1.bf16.msra.mxu0 %v522
    %708 = vmatprep.subr.bf16.mxu0 0
    %709 = vmatpush1.bf16.msra.mxu0 %v523
    %710 = vmatprep.subr.bf16.mxu0 0
    %711 = vmatpush1.bf16.msra.mxu0 %v524
    %712 = vmatprep.subr.bf16.mxu0 0
    %713 = vmatpush1.bf16.msra.mxu0 %v525
    %714 = vmatprep.subr.bf16.mxu0 0
    %715 = vmatpush1.bf16.msra.mxu0 %v526
    %716 = vmatprep.subr.bf16.mxu0 0
    %717 = vmatpush1.bf16.msra.mxu0 %v527
    %718 = vmatprep.subr.bf16.mxu0 0
    %719 = vmatpush1.bf16.msra.mxu0 %v528
    %720 = vmatprep.subr.bf16.mxu0 0
    %721 = vmatpush1.bf16.msra.mxu0 %v529
    %722 = vmatprep.mubr.bf16.mxu0 %v217
    %723 = vmatmul.mubr.bf16.gmra.mrb[0].mxu0 %v216
    %v724 = vpop.f32.mrb[0].mxu0
    %v725 = vadd.f32 %v685, %v724
    %v726 = vpop.f32.mrb[0].mxu0
    %v727 = vpop.f32.mrb[0].mxu0
    %v728 = vpop.f32.mrb[0].mxu0
    %729 = vdwg.mxu0
    %730 = vmatprep.subr.bf16.mxu0 0
    %731 = vmatpush1.bf16.msra.mxu0 %v530
    %732 = vmatprep.subr.bf16.mxu0 0
    %733 = vmatpush1.bf16.msra.mxu0 %v531
    %734 = vmatprep.subr.bf16.mxu0 0
    %735 = vmatpush1.bf16.msra.mxu0 %v532
    %736 = vmatprep.subr.bf16.mxu0 0
    %737 = vmatpush1.bf16.msra.mxu0 %v533
    %738 = vmatprep.subr.bf16.mxu0 0
    %739 = vmatpush1.bf16.msra.mxu0 %v534
    %740 = vmatprep.subr.bf16.mxu0 0
    %741 = vmatpush1.bf16.msra.mxu0 %v535
    %742 = vmatprep.subr.bf16.mxu0 0
    %743 = vmatpush1.bf16.msra.mxu0 %v536
    %744 = vmatprep.subr.bf16.mxu0 0
    %745 = vmatpush1.bf16.msra.mxu0 %v537
    %746 = vmatprep.subr.bf16.mxu0 0
    %747 = vmatpush1.bf16.msra.mxu0 %v538
    %748 = vmatprep.subr.bf16.mxu0 0
    %749 = vmatpush1.bf16.msra.mxu0 %v539
    %750 = vmatprep.subr.bf16.mxu0 0
    %751 = vmatpush1.bf16.msra.mxu0 %v540
    %752 = vmatprep.subr.bf16.mxu0 0
    %753 = vmatpush1.bf16.msra.mxu0 %v541
    %754 = vmatprep.subr.bf16.mxu0 0
    %755 = vmatpush1.bf16.msra.mxu0 %v542
    %756 = vmatprep.subr.bf16.mxu0 0
    %757 = vmatpush1.bf16.msra.mxu0 %v543
    %758 = vmatprep.subr.bf16.mxu0 0
    %759 = vmatpush1.bf16.msra.mxu0 %v544
    %760 = vmatprep.subr.bf16.mxu0 0
    %761 = vmatpush1.bf16.msra.mxu0 %v545
    %762 = vmatprep.mubr.bf16.mxu0 %v219
    %763 = vmatmul.mubr.bf16.gmra.mrb[0].mxu0 %v218
    %v764 = vpop.f32.mrb[0].mxu0
    %v765 = vadd.f32 %v725, %v764
    %v766 = vpop.f32.mrb[0].mxu0
    %v767 = vpop.f32.mrb[0].mxu0
    %v768 = vpop.f32.mrb[0].mxu0
    %769 = vdwg.mxu0
    %v770 = vmax.f32 %v765, 0.0
    %v771 = vpack.c.bf16 %v770, %v770
    %v773 = vlaneseq
    %v774 = vshrl.u32 %v773, 7
    %v775 = vsub.s32 0, %v774
    %v776 = vrot.slane %v165, %v775
    %v782 = vunpack.c.l.b16 %v161
    %v783 = vunpack.c.l.b16 %v162
    %v784 = vunpack.c.l.b16 %v163
    %v785 = vunpack.c.l.b16 %v164
    %v786 = vpack.c.b16 %v783, %v782
    %v787 = vpack.c.b16 %v785, %v784
    %vm790 = vcmask 261120
    %v792 = vsel %vm790, %v771, 0
    %794 = vmatprep.subr.bf16.mxu0 0
    %795 = vmatpush1.bf16.msra.mxu0 %v786
    %796 = vmatprep.subr.bf16.mxu0 0
    %797 = vmatpush1.bf16.msra.mxu0 %v787
    %798 = vmatprep.subr.bf16.mxu0 0
    %799 = vmatpush1.bf16.msra.mxu0 0
    %800 = vmatprep.subr.bf16.mxu0 0
    %801 = vmatpush1.bf16.msra.mxu0 0
    %802 = vmatprep.subr.bf16.mxu0 0
    %803 = vmatpush1.bf16.msra.mxu0 0
    %804 = vmatprep.subr.bf16.mxu0 0
    %805 = vmatpush1.bf16.msra.mxu0 0
    %806 = vmatprep.subr.bf16.mxu0 0
    %807 = vmatpush1.bf16.msra.mxu0 0
    %808 = vmatprep.subr.bf16.mxu0 0
    %809 = vmatpush1.bf16.msra.mxu0 0
    %810 = vmatprep.subr.bf16.mxu0 0
    %811 = vmatpush1.bf16.msra.mxu0 0
    %812 = vmatprep.subr.bf16.mxu0 0
    %813 = vmatpush1.bf16.msra.mxu0 0
    %814 = vmatprep.subr.bf16.mxu0 0
    %815 = vmatpush1.bf16.msra.mxu0 0
    %816 = vmatprep.subr.bf16.mxu0 0
    %817 = vmatpush1.bf16.msra.mxu0 0
    %818 = vmatprep.subr.bf16.mxu0 0
    %819 = vmatpush1.bf16.msra.mxu0 0
    %820 = vmatprep.subr.bf16.mxu0 0
    %821 = vmatpush1.bf16.msra.mxu0 0
    %822 = vmatprep.subr.bf16.mxu0 0
    %823 = vmatpush1.bf16.msra.mxu0 0
    %824 = vmatprep.subr.bf16.mxu0 0
    %825 = vmatpush1.bf16.msra.mxu0 0
    %826 = vmatprep.mubr.bf16.mxu0 0
    %827 = vmatmul.mubr.bf16.gmra.mrb[0].mxu0 %v792
    %v828 = vpop.f32.mrb[0].mxu0
    %v829 = vadd.f32 %v776, %v828
    %v830 = vpop.f32.mrb[0].mxu0
    %v831 = vpop.f32.mrb[0].mxu0
    %v832 = vpop.f32.mrb[0].mxu0
    %833 = vdwg.mxu0
    %834 = vst [vmem:[#allocation2] sm:$0x3] %v829
    %v835 = vld [vmem:[%s1] sm:$0xff]
    %v836 = vld [vmem:[%s1 + $0x8] sm:$0xff]
    %v839 = vcombine.high %v835, %v835
    %v841 = vunpack.c.l.s4 1983009808
    %v842 = vunpack.c.0.s8 %v841
    %v843 = vlaneseq
    %v844 = vshrl.u32 %v843, 7
    %v845 = vsub.s32 %v842, %v844
    %v846 = vrot.slane %v835, %v845
    %v848 = vunpack.c.l.s4 1983009808
    %v849 = vunpack.c.0.s8 %v848
    %v850 = vlaneseq
    %v851 = vshrl.u32 %v850, 7
    %v852 = vsub.s32 %v849, %v851
    %v853 = vrot.slane %v839, %v852
    %v854 = vcombine.high %v846, %v846
    %v855 = vcombine.high %v853, %v853
    %v856 = vcombine.high %v836, %v836
    %v858 = vunpack.c.l.s4 1983009808
    %v859 = vunpack.c.0.s8 %v858
    %v860 = vlaneseq
    %v861 = vshrl.u32 %v860, 7
    %v862 = vsub.s32 %v859, %v861
    %v863 = vrot.slane %v836, %v862
    %v865 = vunpack.c.l.s4 1983009808
    %v866 = vunpack.c.0.s8 %v865
    %v867 = vlaneseq
    %v868 = vshrl.u32 %v867, 7
    %v869 = vsub.s32 %v866, %v868
    %v870 = vrot.slane %v856, %v869
    %v871 = vcombine.high %v863, %v863
    %v872 = vcombine.high %v870, %v870
    %v881 = vpack.c.bf16 %v846, %v846
    %v882 = vpack.c.bf16 %v854, %v854
    %v883 = vpack.c.bf16 %v853, %v853
    %v884 = vpack.c.bf16 %v855, %v855
    %v885 = vpack.c.bf16 %v863, %v863
    %v886 = vpack.c.bf16 %v871, %v871
    %v887 = vpack.c.bf16 %v870, %v870
    %v888 = vpack.c.bf16 %v872, %v872
    %889 = vmatprep.subr.bf16.mxu0 0
    %890 = vmatpush1.bf16.msra.mxu0 %v482
    %891 = vmatprep.subr.bf16.mxu0 0
    %892 = vmatpush1.bf16.msra.mxu0 %v483
    %893 = vmatprep.subr.bf16.mxu0 0
    %894 = vmatpush1.bf16.msra.mxu0 %v484
    %895 = vmatprep.subr.bf16.mxu0 0
    %896 = vmatpush1.bf16.msra.mxu0 %v485
    %897 = vmatprep.subr.bf16.mxu0 0
    %898 = vmatpush1.bf16.msra.mxu0 %v486
    %899 = vmatprep.subr.bf16.mxu0 0
    %900 = vmatpush1.bf16.msra.mxu0 %v487
    %901 = vmatprep.subr.bf16.mxu0 0
    %902 = vmatpush1.bf16.msra.mxu0 %v488
    %903 = vmatprep.subr.bf16.mxu0 0
    %904 = vmatpush1.bf16.msra.mxu0 %v489
    %905 = vmatprep.subr.bf16.mxu0 0
    %906 = vmatpush1.bf16.msra.mxu0 %v490
    %907 = vmatprep.subr.bf16.mxu0 0
    %908 = vmatpush1.bf16.msra.mxu0 %v491
    %909 = vmatprep.subr.bf16.mxu0 0
    %910 = vmatpush1.bf16.msra.mxu0 %v492
    %911 = vmatprep.subr.bf16.mxu0 0
    %912 = vmatpush1.bf16.msra.mxu0 %v493
    %913 = vmatprep.subr.bf16.mxu0 0
    %914 = vmatpush1.bf16.msra.mxu0 %v494
    %915 = vmatprep.subr.bf16.mxu0 0
    %916 = vmatpush1.bf16.msra.mxu0 %v495
    %917 = vmatprep.subr.bf16.mxu0 0
    %918 = vmatpush1.bf16.msra.mxu0 %v496
    %919 = vmatprep.subr.bf16.mxu0 0
    %920 = vmatpush1.bf16.msra.mxu0 %v497
    %921 = vmatprep.mubr.bf16.mxu0 %v882
    %922 = vmatmul.mubr.bf16.gmra.mrb[0].mxu0 %v881
    %v923 = vpop.f32.mrb[0].mxu0
    %v924 = vadd.f32 %v224, %v923
    %v925 = vpop.f32.mrb[0].mxu0
    %v926 = vpop.f32.mrb[0].mxu0
    %v927 = vpop.f32.mrb[0].mxu0
    %928 = vdwg.mxu0
    %929 = vmatprep.subr.bf16.mxu0 0
    %930 = vmatpush1.bf16.msra.mxu0 %v498
    %931 = vmatprep.subr.bf16.mxu0 0
    %932 = vmatpush1.bf16.msra.mxu0 %v499
    %933 = vmatprep.subr.bf16.mxu0 0
    %934 = vmatpush1.bf16.msra.mxu0 %v500
    %935 = vmatprep.subr.bf16.mxu0 0
    %936 = vmatpush1.bf16.msra.mxu0 %v501
    %937 = vmatprep.subr.bf16.mxu0 0
    %938 = vmatpush1.bf16.msra.mxu0 %v502
    %939 = vmatprep.subr.bf16.mxu0 0
    %940 = vmatpush1.bf16.msra.mxu0 %v503
    %941 = vmatprep.subr.bf16.mxu0 0
    %942 = vmatpush1.bf16.msra.mxu0 %v504
    %943 = vmatprep.subr.bf16.mxu0 0
    %944 = vmatpush1.bf16.msra.mxu0 %v505
    %945 = vmatprep.subr.bf16.mxu0 0
    %946 = vmatpush1.bf16.msra.mxu0 %v506
    %947 = vmatprep.subr.bf16.mxu0 0
    %948 = vmatpush1.bf16.msra.mxu0 %v507
    %949 = vmatprep.subr.bf16.mxu0 0
    %950 = vmatpush1.bf16.msra.mxu0 %v508
    %951 = vmatprep.subr.bf16.mxu0 0
    %952 = vmatpush1.bf16.msra.mxu0 %v509
    %953 = vmatprep.subr.bf16.mxu0 0
    %954 = vmatpush1.bf16.msra.mxu0 %v510
    %955 = vmatprep.subr.bf16.mxu0 0
    %956 = vmatpush1.bf16.msra.mxu0 %v511
    %957 = vmatprep.subr.bf16.mxu0 0
    %958 = vmatpush1.bf16.msra.mxu0 %v512
    %959 = vmatprep.subr.bf16.mxu0 0
    %960 = vmatpush1.bf16.msra.mxu0 %v513
    %961 = vmatprep.mubr.bf16.mxu0 %v884
    %962 = vmatmul.mubr.bf16.gmra.mrb[0].mxu0 %v883
    %v963 = vpop.f32.mrb[0].mxu0
    %v964 = vadd.f32 %v924, %v963
    %v965 = vpop.f32.mrb[0].mxu0
    %v966 = vpop.f32.mrb[0].mxu0
    %v967 = vpop.f32.mrb[0].mxu0
    %968 = vdwg.mxu0
    %969 = vmatprep.subr.bf16.mxu0 0
    %970 = vmatpush1.bf16.msra.mxu0 %v514
    %971 = vmatprep.subr.bf16.mxu0 0
    %972 = vmatpush1.bf16.msra.mxu0 %v515
    %973 = vmatprep.subr.bf16.mxu0 0
    %974 = vmatpush1.bf16.msra.mxu0 %v516
    %975 = vmatprep.subr.bf16.mxu0 0
    %976 = vmatpush1.bf16.msra.mxu0 %v517
    %977 = vmatprep.subr.bf16.mxu0 0
    %978 = vmatpush1.bf16.msra.mxu0 %v518
    %979 = vmatprep.subr.bf16.mxu0 0
    %980 = vmatpush1.bf16.msra.mxu0 %v519
    %981 = vmatprep.subr.bf16.mxu0 0
    %982 = vmatpush1.bf16.msra.mxu0 %v520
    %983 = vmatprep.subr.bf16.mxu0 0
    %984 = vmatpush1.bf16.msra.mxu0 %v521
    %985 = vmatprep.subr.bf16.mxu0 0
    %986 = vmatpush1.bf16.msra.mxu0 %v522
    %987 = vmatprep.subr.bf16.mxu0 0
    %988 = vmatpush1.bf16.msra.mxu0 %v523
    %989 = vmatprep.subr.bf16.mxu0 0
    %990 = vmatpush1.bf16.msra.mxu0 %v524
    %991 = vmatprep.subr.bf16.mxu0 0
    %992 = vmatpush1.bf16.msra.mxu0 %v525
    %993 = vmatprep.subr.bf16.mxu0 0
    %994 = vmatpush1.bf16.msra.mxu0 %v526
    %995 = vmatprep.subr.bf16.mxu0 0
    %996 = vmatpush1.bf16.msra.mxu0 %v527
    %997 = vmatprep.subr.bf16.mxu0 0
    %998 = vmatpush1.bf16.msra.mxu0 %v528
    %999 = vmatprep.subr.bf16.mxu0 0
    %1000 = vmatpush1.bf16.msra.mxu0 %v529
    %1001 = vmatprep.mubr.bf16.mxu0 %v886
    %1002 = vmatmul.mubr.bf16.gmra.mrb[0].mxu0 %v885
    %v1003 = vpop.f32.mrb[0].mxu0
    %v1004 = vadd.f32 %v964, %v1003
    %v1005 = vpop.f32.mrb[0].mxu0
    %v1006 = vpop.f32.mrb[0].mxu0
    %v1007 = vpop.f32.mrb[0].mxu0
    %1008 = vdwg.mxu0
    %1009 = vmatprep.subr.bf16.mxu0 0
    %1010 = vmatpush1.bf16.msra.mxu0 %v530
    %1011 = vmatprep.subr.bf16.mxu0 0
    %1012 = vmatpush1.bf16.msra.mxu0 %v531
    %1013 = vmatprep.subr.bf16.mxu0 0
    %1014 = vmatpush1.bf16.msra.mxu0 %v532
    %1015 = vmatprep.subr.bf16.mxu0 0
    %1016 = vmatpush1.bf16.msra.mxu0 %v533
    %1017 = vmatprep.subr.bf16.mxu0 0
    %1018 = vmatpush1.bf16.msra.mxu0 %v534
    %1019 = vmatprep.subr.bf16.mxu0 0
    %1020 = vmatpush1.bf16.msra.mxu0 %v535
    %1021 = vmatprep.subr.bf16.mxu0 0
    %1022 = vmatpush1.bf16.msra.mxu0 %v536
    %1023 = vmatprep.subr.bf16.mxu0 0
    %1024 = vmatpush1.bf16.msra.mxu0 %v537
    %1025 = vmatprep.subr.bf16.mxu0 0
    %1026 = vmatpush1.bf16.msra.mxu0 %v538
    %1027 = vmatprep.subr.bf16.mxu0 0
    %1028 = vmatpush1.bf16.msra.mxu0 %v539
    %1029 = vmatprep.subr.bf16.mxu0 0
    %1030 = vmatpush1.bf16.msra.mxu0 %v540
    %1031 = vmatprep.subr.bf16.mxu0 0
    %1032 = vmatpush1.bf16.msra.mxu0 %v541
    %1033 = vmatprep.subr.bf16.mxu0 0
    %1034 = vmatpush1.bf16.msra.mxu0 %v542
    %1035 = vmatprep.subr.bf16.mxu0 0
    %1036 = vmatpush1.bf16.msra.mxu0 %v543
    %1037 = vmatprep.subr.bf16.mxu0 0
    %1038 = vmatpush1.bf16.msra.mxu0 %v544
    %1039 = vmatprep.subr.bf16.mxu0 0
    %1040 = vmatpush1.bf16.msra.mxu0 %v545
    %1041 = vmatprep.mubr.bf16.mxu0 %v888
    %1042 = vmatmul.mubr.bf16.gmra.mrb[0].mxu0 %v887
    %v1043 = vpop.f32.mrb[0].mxu0
    %v1044 = vadd.f32 %v1004, %v1043
    %v1045 = vpop.f32.mrb[0].mxu0
    %v1046 = vpop.f32.mrb[0].mxu0
    %v1047 = vpop.f32.mrb[0].mxu0
    %1048 = vdwg.mxu0
    %v1049 = vmax.f32 %v1044, 0.0
    %v1050 = vpack.c.bf16 %v1049, %v1049
    %v1052 = vsel %vm790, %v1050, 0
    %1054 = vmatprep.subr.bf16.mxu0 0
    %1055 = vmatpush1.bf16.msra.mxu0 %v786
    %1056 = vmatprep.subr.bf16.mxu0 0
    %1057 = vmatpush1.bf16.msra.mxu0 %v787
    %1058 = vmatprep.subr.bf16.mxu0 0
    %1059 = vmatpush1.bf16.msra.mxu0 0
    %1060 = vmatprep.subr.bf16.mxu0 0
    %1061 = vmatpush1.bf16.msra.mxu0 0
    %1062 = vmatprep.subr.bf16.mxu0 0
    %1063 = vmatpush1.bf16.msra.mxu0 0
    %1064 = vmatprep.subr.bf16.mxu0 0
    %1065 = vmatpush1.bf16.msra.mxu0 0
    %1066 = vmatprep.subr.bf16.mxu0 0
    %1067 = vmatpush1.bf16.msra.mxu0 0
    %1068 = vmatprep.subr.bf16.mxu0 0
    %1069 = vmatpush1.bf16.msra.mxu0 0
    %1070 = vmatprep.subr.bf16.mxu0 0
    %1071 = vmatpush1.bf16.msra.mxu0 0
    %1072 = vmatprep.subr.bf16.mxu0 0
    %1073 = vmatpush1.bf16.msra.mxu0 0
    %1074 = vmatprep.subr.bf16.mxu0 0
    %1075 = vmatpush1.bf16.msra.mxu0 0
    %1076 = vmatprep.subr.bf16.mxu0 0
    %1077 = vmatpush1.bf16.msra.mxu0 0
    %1078 = vmatprep.subr.bf16.mxu0 0
    %1079 = vmatpush1.bf16.msra.mxu0 0
    %1080 = vmatprep.subr.bf16.mxu0 0
    %1081 = vmatpush1.bf16.msra.mxu0 0
    %1082 = vmatprep.subr.bf16.mxu0 0
    %1083 = vmatpush1.bf16.msra.mxu0 0
    %1084 = vmatprep.subr.bf16.mxu0 0
    %1085 = vmatpush1.bf16.msra.mxu0 0
    %1086 = vmatprep.mubr.bf16.mxu0 0
    %1087 = vmatmul.mubr.bf16.gmra.mrb[0].mxu0 %v1052
    %v1088 = vpop.f32.mrb[0].mxu0
    %v1089 = vadd.f32 %v776, %v1088
    %v1090 = vpop.f32.mrb[0].mxu0
    %v1091 = vpop.f32.mrb[0].mxu0
    %v1092 = vpop.f32.mrb[0].mxu0
    %1093 = vdwg.mxu0
    %1094 = vst [vmem:[#allocation4] sm:$0x3] %v1089
    %v1095 = vld [vmem:[%s2] sm:$0xff]
    %v1096 = vld [vmem:[%s2 + $0x8] sm:$0xff]
    %v1099 = vcombine.high %v1095, %v1095
    %v1101 = vunpack.c.l.s4 1983009808
    %v1102 = vunpack.c.0.s8 %v1101
    %v1103 = vlaneseq
    %v1104 = vshrl.u32 %v1103, 7
    %v1105 = vsub.s32 %v1102, %v1104
    %v1106 = vrot.slane %v1095, %v1105
    %v1108 = vunpack.c.l.s4 1983009808
    %v1109 = vunpack.c.0.s8 %v1108
    %v1110 = vlaneseq
    %v1111 = vshrl.u32 %v1110, 7
    %v1112 = vsub.s32 %v1109, %v1111
    %v1113 = vrot.slane %v1099, %v1112
    %v1114 = vcombine.high %v1106, %v1106
    %v1115 = vcombine.high %v1113, %v1113
    %v1116 = vcombine.high %v1096, %v1096
    %v1118 = vunpack.c.l.s4 1983009808
    %v1119 = vunpack.c.0.s8 %v1118
    %v1120 = vlaneseq
    %v1121 = vshrl.u32 %v1120, 7
    %v1122 = vsub.s32 %v1119, %v1121
    %v1123 = vrot.slane %v1096, %v1122
    %v1125 = vunpack.c.l.s4 1983009808
    %v1126 = vunpack.c.0.s8 %v1125
    %v1127 = vlaneseq
    %v1128 = vshrl.u32 %v1127, 7
    %v1129 = vsub.s32 %v1126, %v1128
    %v1130 = vrot.slane %v1116, %v1129
    %v1131 = vcombine.high %v1123, %v1123
    %v1132 = vcombine.high %v1130, %v1130
    %v1141 = vpack.c.bf16 %v1106, %v1106
    %v1142 = vpack.c.bf16 %v1114, %v1114
    %v1143 = vpack.c.bf16 %v1113, %v1113
    %v1144 = vpack.c.bf16 %v1115, %v1115
    %v1145 = vpack.c.bf16 %v1123, %v1123
    %v1146 = vpack.c.bf16 %v1131, %v1131
    %v1147 = vpack.c.bf16 %v1130, %v1130
    %v1148 = vpack.c.bf16 %v1132, %v1132
    %1149 = vmatprep.subr.bf16.mxu0 0
    %1150 = vmatpush1.bf16.msra.mxu0 %v482
    %1151 = vmatprep.subr.bf16.mxu0 0
    %1152 = vmatpush1.bf16.msra.mxu0 %v483
    %1153 = vmatprep.subr.bf16.mxu0 0
    %1154 = vmatpush1.bf16.msra.mxu0 %v484
    %1155 = vmatprep.subr.bf16.mxu0 0
    %1156 = vmatpush1.bf16.msra.mxu0 %v485
    %1157 = vmatprep.subr.bf16.mxu0 0
    %1158 = vmatpush1.bf16.msra.mxu0 %v486
    %1159 = vmatprep.subr.bf16.mxu0 0
    %1160 = vmatpush1.bf16.msra.mxu0 %v487
    %1161 = vmatprep.subr.bf16.mxu0 0
    %1162 = vmatpush1.bf16.msra.mxu0 %v488
    %1163 = vmatprep.subr.bf16.mxu0 0
    %1164 = vmatpush1.bf16.msra.mxu0 %v489
    %1165 = vmatprep.subr.bf16.mxu0 0
    %1166 = vmatpush1.bf16.msra.mxu0 %v490
    %1167 = vmatprep.subr.bf16.mxu0 0
    %1168 = vmatpush1.bf16.msra.mxu0 %v491
    %1169 = vmatprep.subr.bf16.mxu0 0
    %1170 = vmatpush1.bf16.msra.mxu0 %v492
    %1171 = vmatprep.subr.bf16.mxu0 0
    %1172 = vmatpush1.bf16.msra.mxu0 %v493
    %1173 = vmatprep.subr.bf16.mxu0 0
    %1174 = vmatpush1.bf16.msra.mxu0 %v494
    %1175 = vmatprep.subr.bf16.mxu0 0
    %1176 = vmatpush1.bf16.msra.mxu0 %v495
    %1177 = vmatprep.subr.bf16.mxu0 0
    %1178 = vmatpush1.bf16.msra.mxu0 %v496
    %1179 = vmatprep.subr.bf16.mxu0 0
    %1180 = vmatpush1.bf16.msra.mxu0 %v497
    %1181 = vmatprep.mubr.bf16.mxu0 %v1142
    %1182 = vmatmul.mubr.bf16.gmra.mrb[0].mxu0 %v1141
    %v1183 = vpop.f32.mrb[0].mxu0
    %v1184 = vadd.f32 %v224, %v1183
    %v1185 = vpop.f32.mrb[0].mxu0
    %v1186 = vpop.f32.mrb[0].mxu0
    %v1187 = vpop.f32.mrb[0].mxu0
    %1188 = vdwg.mxu0
    %1189 = vmatprep.subr.bf16.mxu0 0
    %1190 = vmatpush1.bf16.msra.mxu0 %v498
    %1191 = vmatprep.subr.bf16.mxu0 0
    %1192 = vmatpush1.bf16.msra.mxu0 %v499
    %1193 = vmatprep.subr.bf16.mxu0 0
    %1194 = vmatpush1.bf16.msra.mxu0 %v500
    %1195 = vmatprep.subr.bf16.mxu0 0
    %1196 = vmatpush1.bf16.msra.mxu0 %v501
    %1197 = vmatprep.subr.bf16.mxu0 0
    %1198 = vmatpush1.bf16.msra.mxu0 %v502
    %1199 = vmatprep.subr.bf16.mxu0 0
    %1200 = vmatpush1.bf16.msra.mxu0 %v503
    %1201 = vmatprep.subr.bf16.mxu0 0
    %1202 = vmatpush1.bf16.msra.mxu0 %v504
    %1203 = vmatprep.subr.bf16.mxu0 0
    %1204 = vmatpush1.bf16.msra.mxu0 %v505
    %1205 = vmatprep.subr.bf16.mxu0 0
    %1206 = vmatpush1.bf16.msra.mxu0 %v506
    %1207 = vmatprep.subr.bf16.mxu0 0
    %1208 = vmatpush1.bf16.msra.mxu0 %v507
    %1209 = vmatprep.subr.bf16.mxu0 0
    %1210 = vmatpush1.bf16.msra.mxu0 %v508
    %1211 = vmatprep.subr.bf16.mxu0 0
    %1212 = vmatpush1.bf16.msra.mxu0 %v509
    %1213 = vmatprep.subr.bf16.mxu0 0
    %1214 = vmatpush1.bf16.msra.mxu0 %v510
    %1215 = vmatprep.subr.bf16.mxu0 0
    %1216 = vmatpush1.bf16.msra.mxu0 %v511
    %1217 = vmatprep.subr.bf16.mxu0 0
    %1218 = vmatpush1.bf16.msra.mxu0 %v512
    %1219 = vmatprep.subr.bf16.mxu0 0
    %1220 = vmatpush1.bf16.msra.mxu0 %v513
    %1221 = vmatprep.mubr.bf16.mxu0 %v1144
    %1222 = vmatmul.mubr.bf16.gmra.mrb[0].mxu0 %v1143
    %v1223 = vpop.f32.mrb[0].mxu0
    %v1224 = vadd.f32 %v1184, %v1223
    %v1225 = vpop.f32.mrb[0].mxu0
    %v1226 = vpop.f32.mrb[0].mxu0
    %v1227 = vpop.f32.mrb[0].mxu0
    %1228 = vdwg.mxu0
    %1229 = vmatprep.subr.bf16.mxu0 0
    %1230 = vmatpush1.bf16.msra.mxu0 %v514
    %1231 = vmatprep.subr.bf16.mxu0 0
    %1232 = vmatpush1.bf16.msra.mxu0 %v515
    %1233 = vmatprep.subr.bf16.mxu0 0
    %1234 = vmatpush1.bf16.msra.mxu0 %v516
    %1235 = vmatprep.subr.bf16.mxu0 0
    %1236 = vmatpush1.bf16.msra.mxu0 %v517
    %1237 = vmatprep.subr.bf16.mxu0 0
    %1238 = vmatpush1.bf16.msra.mxu0 %v518
    %1239 = vmatprep.subr.bf16.mxu0 0
    %1240 = vmatpush1.bf16.msra.mxu0 %v519
    %1241 = vmatprep.subr.bf16.mxu0 0
    %1242 = vmatpush1.bf16.msra.mxu0 %v520
    %1243 = vmatprep.subr.bf16.mxu0 0
    %1244 = vmatpush1.bf16.msra.mxu0 %v521
    %1245 = vmatprep.subr.bf16.mxu0 0
    %1246 = vmatpush1.bf16.msra.mxu0 %v522
    %1247 = vmatprep.subr.bf16.mxu0 0
    %1248 = vmatpush1.bf16.msra.mxu0 %v523
    %1249 = vmatprep.subr.bf16.mxu0 0
    %1250 = vmatpush1.bf16.msra.mxu0 %v524
    %1251 = vmatprep.subr.bf16.mxu0 0
    %1252 = vmatpush1.bf16.msra.mxu0 %v525
    %1253 = vmatprep.subr.bf16.mxu0 0
    %1254 = vmatpush1.bf16.msra.mxu0 %v526
    %1255 = vmatprep.subr.bf16.mxu0 0
    %1256 = vmatpush1.bf16.msra.mxu0 %v527
    %1257 = vmatprep.subr.bf16.mxu0 0
    %1258 = vmatpush1.bf16.msra.mxu0 %v528
    %1259 = vmatprep.subr.bf16.mxu0 0
    %1260 = vmatpush1.bf16.msra.mxu0 %v529
    %1261 = vmatprep.mubr.bf16.mxu0 %v1146
    %1262 = vmatmul.mubr.bf16.gmra.mrb[0].mxu0 %v1145
    %v1263 = vpop.f32.mrb[0].mxu0
    %v1264 = vadd.f32 %v1224, %v1263
    %v1265 = vpop.f32.mrb[0].mxu0
    %v1266 = vpop.f32.mrb[0].mxu0
    %v1267 = vpop.f32.mrb[0].mxu0
    %1268 = vdwg.mxu0
    %1269 = vmatprep.subr.bf16.mxu0 0
    %1270 = vmatpush1.bf16.msra.mxu0 %v530
    %1271 = vmatprep.subr.bf16.mxu0 0
    %1272 = vmatpush1.bf16.msra.mxu0 %v531
    %1273 = vmatprep.subr.bf16.mxu0 0
    %1274 = vmatpush1.bf16.msra.mxu0 %v532
    %1275 = vmatprep.subr.bf16.mxu0 0
    %1276 = vmatpush1.bf16.msra.mxu0 %v533
    %1277 = vmatprep.subr.bf16.mxu0 0
    %1278 = vmatpush1.bf16.msra.mxu0 %v534
    %1279 = vmatprep.subr.bf16.mxu0 0
    %1280 = vmatpush1.bf16.msra.mxu0 %v535
    %1281 = vmatprep.subr.bf16.mxu0 0
    %1282 = vmatpush1.bf16.msra.mxu0 %v536
    %1283 = vmatprep.subr.bf16.mxu0 0
    %1284 = vmatpush1.bf16.msra.mxu0 %v537
    %1285 = vmatprep.subr.bf16.mxu0 0
    %1286 = vmatpush1.bf16.msra.mxu0 %v538
    %1287 = vmatprep.subr.bf16.mxu0 0
    %1288 = vmatpush1.bf16.msra.mxu0 %v539
    %1289 = vmatprep.subr.bf16.mxu0 0
    %1290 = vmatpush1.bf16.msra.mxu0 %v540
    %1291 = vmatprep.subr.bf16.mxu0 0
    %1292 = vmatpush1.bf16.msra.mxu0 %v541
    %1293 = vmatprep.subr.bf16.mxu0 0
    %1294 = vmatpush1.bf16.msra.mxu0 %v542
    %1295 = vmatprep.subr.bf16.mxu0 0
    %1296 = vmatpush1.bf16.msra.mxu0 %v543
    %1297 = vmatprep.subr.bf16.mxu0 0
    %1298 = vmatpush1.bf16.msra.mxu0 %v544
    %1299 = vmatprep.subr.bf16.mxu0 0
    %1300 = vmatpush1.bf16.msra.mxu0 %v545
    %1301 = vmatprep.mubr.bf16.mxu0 %v1148
    %1302 = vmatmul.mubr.bf16.gmra.mrb[0].mxu0 %v1147
    %v1303 = vpop.f32.mrb[0].mxu0
    %v1304 = vadd.f32 %v1264, %v1303
    %v1305 = vpop.f32.mrb[0].mxu0
    %v1306 = vpop.f32.mrb[0].mxu0
    %v1307 = vpop.f32.mrb[0].mxu0
    %1308 = vdwg.mxu0
    %v1309 = vmax.f32 %v1304, 0.0
    %v1310 = vpack.c.bf16 %v1309, %v1309
    %v1312 = vsel %vm790, %v1310, 0
    %1314 = vmatprep.subr.bf16.mxu0 0
    %1315 = vmatpush1.bf16.msra.mxu0 %v786
    %1316 = vmatprep.subr.bf16.mxu0 0
    %1317 = vmatpush1.bf16.msra.mxu0 %v787
    %1318 = vmatprep.subr.bf16.mxu0 0
    %1319 = vmatpush1.bf16.msra.mxu0 0
    %1320 = vmatprep.subr.bf16.mxu0 0
    %1321 = vmatpush1.bf16.msra.mxu0 0
    %1322 = vmatprep.subr.bf16.mxu0 0
    %1323 = vmatpush1.bf16.msra.mxu0 0
    %1324 = vmatprep.subr.bf16.mxu0 0
    %1325 = vmatpush1.bf16.msra.mxu0 0
    %1326 = vmatprep.subr.bf16.mxu0 0
    %1327 = vmatpush1.bf16.msra.mxu0 0
    %1328 = vmatprep.subr.bf16.mxu0 0
    %1329 = vmatpush1.bf16.msra.mxu0 0
    %1330 = vmatprep.subr.bf16.mxu0 0
    %1331 = vmatpush1.bf16.msra.mxu0 0
    %1332 = vmatprep.subr.bf16.mxu0 0
    %1333 = vmatpush1.bf16.msra.mxu0 0
    %1334 = vmatprep.subr.bf16.mxu0 0
    %1335 = vmatpush1.bf16.msra.mxu0 0
    %1336 = vmatprep.subr.bf16.mxu0 0
    %1337 = vmatpush1.bf16.msra.mxu0 0
    %1338 = vmatprep.subr.bf16.mxu0 0
    %1339 = vmatpush1.bf16.msra.mxu0 0
    %1340 = vmatprep.subr.bf16.mxu0 0
    %1341 = vmatpush1.bf16.msra.mxu0 0
    %1342 = vmatprep.subr.bf16.mxu0 0
    %1343 = vmatpush1.bf16.msra.mxu0 0
    %1344 = vmatprep.subr.bf16.mxu0 0
    %1345 = vmatpush1.bf16.msra.mxu0 0
    %1346 = vmatprep.mubr.bf16.mxu0 0
    %1347 = vmatmul.mubr.bf16.gmra.mrb[0].mxu0 %v1312
    %v1348 = vpop.f32.mrb[0].mxu0
    %v1349 = vadd.f32 %v776, %v1348
    %v1350 = vpop.f32.mrb[0].mxu0
    %v1351 = vpop.f32.mrb[0].mxu0
    %v1352 = vpop.f32.mrb[0].mxu0
    %1353 = vdwg.mxu0
    %1354 = vst [vmem:[#allocation6] sm:$0x3] %v1349
    // Predicated region
    $region30: #{_triplet_forward.1} parent=1 // pred_check
      _
    $region31: #{_triplet_forward.1} parent=1 // pred_check_branch
      %1356 = sbr.rel (0) target = $region33
    $region32: #{_triplet_forward.1} parent=1 // pred_region
      %s1358 = ssub.s32 32, 32
      %1359 = vsyncadd [#allocation3], %s1358
      %s1361 = sshll.u32 [#allocation2], 4
      %s1362 = int_to_ptr.vmem [resolvable:$true] %s1361
      %1364 = dma.vmem_to_hbm [thread:$0]  %s1362, 32, %s7, [#allocation3]
    $region33: #{_triplet_forward.1} parent=1 // pred_fallthru
      _
    // Predicated region
    $region34: #{_triplet_forward.1} parent=1 // pred_check
      _
    $region35: #{_triplet_forward.1} parent=1 // pred_check_branch
      %1366 = sbr.rel (0) target = $region37
    $region36: #{_triplet_forward.1} parent=1 // pred_region
      %s1368 = ssub.s32 32, 32
      %1369 = vsyncadd [#allocation5], %s1368
      %s1371 = sshll.u32 [#allocation4], 4
      %s1372 = int_to_ptr.vmem [resolvable:$true] %s1371
      %1374 = dma.vmem_to_hbm [thread:$0]  %s1372, 32, %s8, [#allocation5]
    $region37: #{_triplet_forward.1} parent=1 // pred_fallthru
      _
    // Predicated region
    $region38: #{_triplet_forward.1} parent=1 // pred_check
      _
    $region39: #{_triplet_forward.1} parent=1 // pred_check_branch
      %1376 = sbr.rel (0) target = $region41
    $region40: #{_triplet_forward.1} parent=1 // pred_region
      %s1378 = ssub.s32 32, 32
      %1379 = vsyncadd [#allocation5], %s1378
      %s1381 = sshll.u32 [#allocation6], 4
      %s1382 = int_to_ptr.vmem [resolvable:$true] %s1381
      %1384 = dma.vmem_to_hbm [thread:$0]  %s1382, 32, %s9, [#allocation5]
    $region41: #{_triplet_forward.1} parent=1 // pred_fallthru
      _
    // Predicated region
    $region42: #{_triplet_forward.1} parent=1 // pred_check
      _
    $region43: #{_triplet_forward.1} parent=1 // pred_check_branch
      %1386 = sbr.rel (0) target = $region45
    $region44: #{_triplet_forward.1} parent=1 // pred_region
      %1387 = dma.done [#allocation3], 32
    $region45: #{_triplet_forward.1} parent=1 // pred_fallthru
      _
    // Predicated region
    $region46: #{_triplet_forward.1} parent=1 // pred_check
      _
    $region47: #{_triplet_forward.1} parent=1 // pred_check_branch
      %1389 = sbr.rel (0) target = $region49
    $region48: #{_triplet_forward.1} parent=1 // pred_region
      %1390 = dma.done [#allocation5], 32
    $region49: #{_triplet_forward.1} parent=1 // pred_fallthru
      _
    // Predicated region
    $region50: #{_triplet_forward.1} parent=1 // pred_check
      _
    $region51: #{_triplet_forward.1} parent=1 // pred_check_branch
      %1392 = sbr.rel (0) target = $region53
    $region52: #{_triplet_forward.1} parent=1 // pred_region
      %1393 = dma.done [#allocation5], 32
    $region53: #{_triplet_forward.1} parent=1 // pred_fallthru
      _
    %1394 = vsyncpa [#allocation3], 1
    %1395 = vsyncpa [#allocation5], 1

</llo_original>
